<compile_context>
chip_gen: v5e
topology: v5e:2x2
jax: 0.10.0
libtpu: 0.0.40
codegen_flags: <defaults>
</compile_context>

<pallas_src>
import jax
import jax.numpy as jnp
from jax.experimental import pallas as pl
from jax.experimental.pallas import tpu as pltpu

_LANES = 128


# ----------------------------------------------------------------------------
# Kernel: mean(|x - label|) with label a runtime f32 scalar in SMEM.
# pad_count / inv_n are compile-time constants (zero-pad bias correction).
# ----------------------------------------------------------------------------
def _make_gan_loss_kernel(inv_n, pad_count):
    inv_n = float(inv_n)
    pad_count = int(pad_count)

    def kernel(x_ref, label_ref, o_ref):
        label = label_ref[0]                          # f32 scalar from SMEM
        x = x_ref[...].astype(jnp.float32)            # in-kernel cast (bf16-safe on v5e)
        s = jnp.sum(jnp.abs(x - label))               # VPU abs/sub + XLU cross-lane reduce
        if pad_count:
            # zero-padded tail contributes |0 - label| = label per element
            s = s - jnp.float32(pad_count) * label
        o_ref[0] = s * inv_n                          # scalar to SMEM output

    return kernel


# ----------------------------------------------------------------------------
# Fused-pair kernel: both losses (label=0 and label=1) from one DMA of x.
# ----------------------------------------------------------------------------
def _make_gan_loss_pair_kernel(inv_n, pad_count):
    inv_n = float(inv_n)
    pad_count = int(pad_count)

    def kernel(x_ref, o_ref):
        x = x_ref[...].astype(jnp.float32)
        s_fake = jnp.sum(jnp.abs(x))                  # label = 0 (pad adds 0)
        s_real = jnp.sum(jnp.abs(x - 1.0))            # label = 1 (pad adds 1 each)
        if pad_count:
            s_real = s_real - jnp.float32(pad_count)
        o_ref[0] = s_fake * inv_n
        o_ref[1] = s_real * inv_n

    return kernel


def _lane_dense_slab(x):
    """Flatten and zero-pad to a lane-dense (rows, 128) slab (native dtype)."""
    n = x.size                                        # static under jit
    flat = x.reshape(-1)
    pad = (-n) % _LANES
    if pad:
        flat = jnp.pad(flat, (0, pad))                # zero pad; bias fixed in-kernel
    return flat.reshape(-1, _LANES), pad


@jax.jit
def gan_loss(d_last_layer, is_d_input_real):
    """d_last_layer: (1,1,S,S) map (any float dtype); is_d_input_real: bool -> f32 loss."""
    n = d_last_layer.size
    x2d, pad = _lane_dense_slab(d_last_layer)         # native dtype; cast in-kernel

    # Scalar label (1.0 real / 0.0 fake) — 1-D f32[1] SMEM, no label tensor DMA.
    label = jnp.where(is_d_input_real, jnp.float32(1.0), jnp.float32(0.0)).reshape(1)

    out = pl.pallas_call(
        _make_gan_loss_kernel(1.0 / n, pad),
        out_shape=jax.ShapeDtypeStruct((1,), jnp.float32),
        in_specs=[
            pl.BlockSpec(memory_space=pltpu.MemorySpace.VMEM),   # lane-dense slab
            pl.BlockSpec(memory_space=pltpu.MemorySpace.SMEM),   # scalar label
        ],
        out_specs=pl.BlockSpec(memory_space=pltpu.MemorySpace.SMEM),
        cost_estimate=pl.CostEstimate(
            flops=2 * n, transcendentals=0,
            bytes_accessed=x2d.size * x2d.dtype.itemsize + 8),
    )(x2d, label)
    return out[0]


@jax.jit
def gan_loss_pair(d_last_layer):
    """Both losses in one launch: returns (loss_fake, loss_real)."""
    n = d_last_layer.size
    x2d, pad = _lane_dense_slab(d_last_layer)

    out = pl.pallas_call(
        _make_gan_loss_pair_kernel(1.0 / n, pad),
        out_shape=jax.ShapeDtypeStruct((2,), jnp.float32),
        in_specs=[pl.BlockSpec(memory_space=pltpu.MemorySpace.VMEM)],
        out_specs=pl.BlockSpec(memory_space=pltpu.MemorySpace.SMEM),
        cost_estimate=pl.CostEstimate(
            flops=4 * n, transcendentals=0,
            bytes_accessed=x2d.size * x2d.dtype.itemsize + 8),
    )(x2d)
    return out[0], out[1]


# ----------------------------------------------------------------------------
# Module-style wrapper (mirrors the PyTorch GANLoss module)
# ----------------------------------------------------------------------------
class GANLoss:
    """D outputs a [0,1] map of size of the input. This map is compared
    pixel-wise to 1/0 according to whether the input is real or fake."""

    def __init__(self, d_last_layer_size):
        # No label tensors are materialized — the label is a runtime scalar.
        self.d_last_layer_shape = (1, 1, d_last_layer_size, d_last_layer_size)

    def __call__(self, d_last_layer, is_d_input_real):
        return gan_loss(d_last_layer, is_d_input_real)


if __name__ == "__main__":
    d_last_layer_size = 16  # D-output map: (1, 1, 16, 16)

    key = jax.random.PRNGKey(0)
    d_out = jax.random.uniform(
        key, (1, 1, d_last_layer_size, d_last_layer_size), dtype=jnp.float32
    )

    loss_mod = GANLoss(d_last_layer_size)

    # Module-style single-label calls.
    loss_fake = jax.block_until_ready(loss_mod(d_out, False))
    loss_real = jax.block_until_ready(loss_mod(d_out, True))

    # Fused variant: both labels, one DMA, one launch.
    pair_fake, pair_real = jax.block_until_ready(gan_loss_pair(d_out))

    ref_fake = jnp.mean(jnp.abs(d_out - 0.0))
    ref_real = jnp.mean(jnp.abs(d_out - 1.0))
    assert jnp.allclose(loss_fake, ref_fake, rtol=1e-6, atol=1e-6), (loss_fake, ref_fake)
    assert jnp.allclose(loss_real, ref_real, rtol=1e-6, atol=1e-6), (loss_real, ref_real)
    assert jnp.allclose(pair_fake, ref_fake, rtol=1e-6, atol=1e-6), (pair_fake, ref_fake)
    assert jnp.allclose(pair_real, ref_real, rtol=1e-6, atol=1e-6), (pair_real, ref_real)

    # Exercise the in-kernel cast + lane-pad correction path:
    # bf16 input, 10x10 map (100 elements, not a multiple of 128).
    d_odd = jax.random.uniform(
        jax.random.PRNGKey(0), (1, 1, 10, 10), dtype=jnp.float32
    ).astype(jnp.bfloat16)
    odd_fake = jax.block_until_ready(gan_loss(d_odd, False))
    odd_real = jax.block_until_ready(gan_loss(d_odd, True))
    d_odd_f32 = d_odd.astype(jnp.float32)
    ref_odd_fake = jnp.mean(jnp.abs(d_odd_f32 - 0.0))
    ref_odd_real = jnp.mean(jnp.abs(d_odd_f32 - 1.0))
    assert jnp.allclose(odd_fake, ref_odd_fake, rtol=1e-5, atol=1e-5), (odd_fake, ref_odd_fake)
    assert jnp.allclose(odd_real, ref_odd_real, rtol=1e-5, atol=1e-5), (odd_real, ref_odd_real)

    print("KERNEL_OK")
</pallas_src>

<mosaic_0001>
module attributes {stable_mosaic.version = 11 : i64} {
  func.func @kernel(%arg0: memref<2x128xf32, #tpu.memory_space<vmem>>, %arg1: memref<1xf32, #tpu.memory_space<smem>>, %arg2: memref<1xf32, #tpu.memory_space<smem>>) attributes {dimension_semantics = [], scalar_prefetch = 0 : i64, scratch_operands = 0 : i64, tpu.core_type = #tpu.core_type<tc>} {
    %c0 = arith.constant 0 : index
    %0 = memref.load %arg1[%c0] : memref<1xf32, #tpu.memory_space<smem>>
    %c0_0 = arith.constant 0 : index
    %c0_1 = arith.constant 0 : index
    %1 = vector.load %arg0[%c0_0, %c0_1] : memref<2x128xf32, #tpu.memory_space<vmem>>, vector<2x128xf32>
    %2 = vector.broadcast %0 : f32 to vector<2x128xf32>
    %3 = arith.subf %1, %2 : vector<2x128xf32>
    %4 = math.absf %3 : vector<2x128xf32>
    %5 = vector.shape_cast %4 : vector<2x128xf32> to vector<1x2x128xf32>
    %cst = arith.constant dense<0.000000e+00> : vector<1xf32>
    %6 = vector.multi_reduction <add>, %5, %cst [1, 2] : vector<1x2x128xf32> to vector<1xf32>
    %7 = vector.shape_cast %6 : vector<1xf32> to vector<1x1x1xf32>
    %8 = vector.extract %7[0, 0, 0] : f32 from vector<1x1x1xf32>
    %cst_2 = arith.constant 3.906250e-03 : f32
    %9 = arith.mulf %8, %cst_2 : f32
    %c0_3 = arith.constant 0 : index
    %10 = memref.load %arg2[%c0_3] : memref<1xf32, #tpu.memory_space<smem>>
    memref.store %9, %arg2[%c0_3] : memref<1xf32, #tpu.memory_space<smem>>
    return
  }
}

</mosaic_0001>

<llo_original>
// kernel: gan_loss.1
$region0: #{gan_loss.1}
  #allocation0 [shape = 'u32[]', space=smem, size = 0x4, offset = 0x4, fixed_abs, tag = 'smem constant byte address 0x4 - core index']
  #allocation1 [shape = 'u32[72,128]{1,0:T(1,128)}', space=vmem, size = 0x9000, scoped, tag = 'internal scratch']
  #allocation2 [shape = 'f32[1]{0:T(128)S(6)}', space=smem, size = 0x200, scoped, tag = 'scoped memory for gan_loss.1']
  %s0 = inlined_call_operand.vmem [shape: f32[2,128], index: 0, kind: input, shape index: {}]
  %s1 = inlined_call_operand.<no memory space> [shape: f32[1], index: 1, kind: input, shape index: {}]
  %s2 = inlined_call_operand.hbm [shape: f32[1], index: 2, kind: output, shape index: {}]
  %s3 = sld [smem:[#allocation0]]
  $region18: #{gan_loss.1} parent=0
    _
  %s5 = ssub.s32 1, %s3
  %s6 = scalar_select 0, %s5, %s3
  %7 = sst [smem:[#allocation2]] %s1
  $region1: #{gan_loss.1} parent=0
    #allocation3 [shape = 'u8[512]{0}', space=smem, size = 0x200, scoped, tag = 'output window, operand 0, single buffered']
    #allocation4 [shape = 's32[1]{0}', space=sflag, size = 0x4, scoped, tag = 'scoped memory for gan_loss.1']
    %8 = vsyncpa [#allocation4], 0
    // Predicated region
    $region2: #{gan_loss.1} parent=1 // pred_check
      _
    $region3: #{gan_loss.1} parent=1 // pred_check_branch
      %10 = sbr.rel (0) target = $region5
    $region4: #{gan_loss.1} parent=1 // pred_region
      _
    $region5: #{gan_loss.1} parent=1 // pred_fallthru
      _
    // Predicated region
    $region6: #{gan_loss.1} parent=1 // pred_check
      _
    $region7: #{gan_loss.1} parent=1 // pred_check_branch
      %12 = sbr.rel (0) target = $region9
    $region8: #{gan_loss.1} parent=1 // pred_region
      _
    $region9: #{gan_loss.1} parent=1 // pred_fallthru
      _
    %s13 = sld [smem:[#allocation2]]
    %v14 = vld [vmem:[%s0] sm:$0x3]
    %v15 = vstv %s13
    %v16 = vsub.f32 %v14, %v15
    %v17 = vand.u32 2147483647, %v16
    %vm18 = vcmask 1041408
    %v19 = vsel %vm18, %v17, 0.0
    %20 = vadd.xlane.f32.xlu0 %v19
    %v21 = vpop.xlane.xlu0 %20
    %v22 = vrot.slane %v21, 4
    %v23 = vadd.f32 %v21, %v22
    %v24 = vrot.slane %v23, 2
    %v25 = vadd.f32 %v23, %v24
    %v26 = vrot.slane %v25, 1
    %v27 = vadd.f32 %v25, %v26
    %s28 = vtos %v27
    %s29 = smul.f32 %s28, 0.00390625
    %s30 = scalar_lea.smem [#allocation3], 0
    %31 = sst [smem:[%s30]] %s29
    // Predicated region
    $region10: #{gan_loss.1} parent=1 // pred_check
      _
    $region11: #{gan_loss.1} parent=1 // pred_check_branch
      %33 = sbr.rel (0) target = $region13
    $region12: #{gan_loss.1} parent=1 // pred_region
      %35 = vsyncadd [#allocation4], 0
      %s37 = sshll.u32 %s2, 4
      %s38 = int_to_ptr.hbm [resolvable:$true] %s37
      %40 = dma.smem_to_hbm [#allocation3], 16, %s38, [#allocation4]
    $region13: #{gan_loss.1} parent=1 // pred_fallthru
      _
    // Predicated region
    $region14: #{gan_loss.1} parent=1 // pred_check
      _
    $region15: #{gan_loss.1} parent=1 // pred_check_branch
      %42 = sbr.rel (0) target = $region17
    $region16: #{gan_loss.1} parent=1 // pred_region
      %44 = dma.done [#allocation4], 16
    $region17: #{gan_loss.1} parent=1 // pred_fallthru
      _
    %45 = sfence
    %46 = vsyncpa [#allocation4], 1

</llo_original>
